<compile_context>
chip_gen: v6e
topology: v6e:2x2x1
jax: 0.10.0
libtpu: 0.0.40
codegen_flags: <defaults>
</compile_context>

<pallas_src>
import jax
import jax.numpy as jnp
from jax import lax
from jax.experimental import pallas as pl
from jax.experimental.pallas import tpu as pltpu


# --------------------------------------------------------------------------
# Small helpers
# --------------------------------------------------------------------------
def _round_up(x, m):
    return ((x + m - 1) // m) * m


def _sublane_pad(c, dtype_bytes):
    """Rows actually occupied in VMEM by a tile with `c` rows of this dtype."""
    packing = max(1, 4 // max(dtype_bytes, 1))
    return _round_up(max(c, 1), 8 * packing)


def _vmem_info():
    """(physical VMEM bytes, budget for pipelined blocks, compiler limit)."""
    try:
        cap = int(pltpu.get_tpu_info().vmem_capacity_bytes)
    except Exception:
        cap = 64 * 1024 * 1024          # conservative (v7x-sized) fallback
    block_budget = int(cap * 0.45)       # what we let the blocks themselves use
    vmem_limit = int(cap * 0.75)         # raise the default scoped limit
    return cap, block_budget, vmem_limit


def _choose_lane_block(hw, cap_lanes, *, min_blocks=1):
    """Largest pixel (lane) block that divides hw exactly.

    Returns blk with hw % blk == 0 and (blk == hw or blk % 128 == 0), or None
    if no such block fits within cap_lanes (caller must pad - rare)."""
    cap_lanes = max(128, cap_lanes)
    if min_blocks <= 1 and hw <= cap_lanes:
        return hw                                        # full extent, always legal
    limit = min(cap_lanes, hw // max(min_blocks, 1), hw)
    for k in range(limit // 128, 0, -1):
        blk = 128 * k
        if hw % blk == 0:
            return blk
    if hw <= cap_lanes:
        return hw            # could not honour min_blocks; full extent still fine
    return None


def _vpu_chunk(c_out, blk):
    """In-kernel pixel chunk so the (C_out, chunk) f32 acc stays ~<=12 vregs."""
    cap = ((12 * 1024) // max(c_out, 1)) // 128 * 128
    cap = max(128, min(512, cap))
    return min(blk, cap)


# --------------------------------------------------------------------------
# Kernels
# --------------------------------------------------------------------------
def _make_vpu_kernel(c_in, c_out, blk):
    """Tiny-channel path: broadcast multiply-adds on the VPU.

    The DMA block (blk lanes) is large; compute walks it in vreg-sized chunks
    so the f32 accumulator never spills.  x rows are read per channel inside
    the loop (no whole-tile f32 temporary)."""
    chunk = _vpu_chunk(c_out, blk)
    n_full = blk // chunk
    rem = blk - n_full * chunk

    def compute_chunk(x_ref, w, b, o_ref, p0, width):
        acc = jnp.broadcast_to(b, (c_out, width))               # start from bias
        for c in range(c_in):                                    # static unroll
            xr = x_ref[pl.ds(c, 1), pl.ds(p0, width)].astype(jnp.float32)
            acc = acc + w[:, c:c + 1] * xr
        o_ref[:, pl.ds(p0, width)] = acc.astype(o_ref.dtype)

    def kernel(x_ref, w_ref, b_ref, o_ref):
        # x_ref: (C_in, blk)  w_ref: (C_out, C_in)  b_ref: (C_out, 1)  o_ref: (C_out, blk)
        w = w_ref[...].astype(jnp.float32)     # tiny; hoisted once per grid step
        b = b_ref[...].astype(jnp.float32)     # (C_out, 1)
        if n_full > 0:
            if n_full <= 8:                    # short: full trace-time unroll
                for i in range(n_full):
                    compute_chunk(x_ref, w, b, o_ref, i * chunk, chunk)
            else:
                def body(i, carry):
                    p0 = pl.multiple_of(i * chunk, chunk)
                    compute_chunk(x_ref, w, b, o_ref, p0, chunk)
                    return carry
                lax.fori_loop(0, n_full, body, 0)
        if rem > 0:                            # static tail chunk
            compute_chunk(x_ref, w, b, o_ref, n_full * chunk, rem)

    return kernel


def _mxu_single_kernel(x_ref, w_ref, b_ref, o_ref):
    # x_ref: (C_in, blk)  w_ref: (C_out, C_in)  b_ref: (C_out, 1)  o_ref: (C_out, blk)
    acc = jnp.dot(w_ref[...], x_ref[...], preferred_element_type=jnp.float32)
    o_ref[...] = (acc + b_ref[...].astype(jnp.float32)).astype(o_ref.dtype)


def _mxu_ktiled_kernel(x_ref, w_ref, b_ref, o_ref, acc_ref):
    # Innermost grid axis (2) is the C_in contraction, marked "arbitrary".
    k = pl.program_id(2)

    @pl.when(k == 0)
    def _():
        acc_ref[...] = jnp.zeros_like(acc_ref)

    acc_ref[...] += jnp.dot(w_ref[...], x_ref[...],
                            preferred_element_type=jnp.float32)

    @pl.when(k == pl.num_programs(2) - 1)
    def _():
        o_ref[...] = (acc_ref[...] + b_ref[...].astype(jnp.float32)
                      ).astype(o_ref.dtype)


# --------------------------------------------------------------------------
# Wrapper
# --------------------------------------------------------------------------
def linear_1x1_conv(x_nchw, weight, bias):
    """1x1 Conv2d with bias (== per-pixel linear). NCHW in / NCHW out.

    x_nchw: (B, C_in, H, W)
    weight: (C_out, C_in)   -- squeezed Conv2d weight (C_out, C_in, 1, 1)
    bias:   (C_out,)
    returns (B, C_out, H, W)
    """
    B, C_in, H, W = x_nchw.shape
    C_out = weight.shape[0]
    HW = H * W
    db = jnp.dtype(x_nchw.dtype).itemsize

    _, block_budget, vmem_limit = _vmem_info()

    # Mid-size channel counts are HBM-bound; keep them on the VPU path.
    use_vpu = C_in <= 64 and C_out <= 64

    # Contraction (K) tiling for the large-channel MXU path.
    tk, n_k = C_in, 1
    if not use_vpu and C_in > 1024:
        for cand in (1024, 512, 256, 128, 64, 32, 16, 8):
            if C_in % cand == 0:
                tk, n_k = cand, C_in // cand
                break
    # TODO(synk): also tile C_out for extreme C_out (>~16K) where even a
    # 128-lane pixel block plus the (C_out, blk) accumulator overflows VMEM.

    # VMEM footprint model (double-buffered x/out tiles + weight/bias tiles
    # + f32 accumulator scratch, with sublane padding of the thin channel dims).
    sp_in = _sublane_pad(tk, db)
    sp_out = _sublane_pad(C_out, db)
    fixed = 2 * sp_out * _round_up(tk, 128) * db + 2 * sp_out * 128 * db
    per_lane = 2 * sp_in * db + 2 * sp_out * db
    if (not use_vpu) and n_k > 1:
        per_lane += sp_out * 4                       # f32 accumulator scratch
    cap_lanes = max(128, ((block_budget - fixed) // per_lane) // 128 * 128)

    min_blocks = 2 if B == 1 else 1                  # keep both v7x TCs busy
    blk = _choose_lane_block(HW, cap_lanes, min_blocks=min_blocks)

    x = x_nchw.reshape(B, C_in, HW)                  # free reshape, no transpose
    padded = False
    if blk is None:
        # Rare fallback: huge HW with no 128-aligned divisor inside the budget.
        blk = cap_lanes
        HW_pad = pl.cdiv(HW, blk) * blk
        x = jnp.pad(x, ((0, 0), (0, 0), (0, HW_pad - HW)))
        padded = True
    else:
        HW_pad = HW
    n_pix = HW_pad // blk

    b_col = bias.reshape(C_out, 1)

    flops = 2 * B * HW * C_in * C_out
    bytes_accessed = db * (B * HW * C_in + C_in * C_out + C_out + B * HW * C_out)
    cost = pl.CostEstimate(flops=flops, transcendentals=0,
                           bytes_accessed=bytes_accessed)

    if use_vpu or n_k == 1:
        kernel = _make_vpu_kernel(C_in, C_out, blk) if use_vpu else _mxu_single_kernel
        grid_spec = pltpu.PrefetchScalarGridSpec(
            num_scalar_prefetch=0,
            grid=(B, n_pix),
            in_specs=[
                # batch squeezed; pixels (lane axis) blocked, channels full.
                pl.BlockSpec((None, C_in, blk), lambda b, j: (b, 0, j)),
                pl.BlockSpec((C_out, C_in), lambda b, j: (0, 0)),
                pl.BlockSpec((C_out, 1), lambda b, j: (0, 0)),
            ],
            out_specs=pl.BlockSpec((None, C_out, blk), lambda b, j: (b, 0, j)),
        )
        dim_sem = ("parallel", "parallel")
    else:
        kernel = _mxu_ktiled_kernel
        grid_spec = pltpu.PrefetchScalarGridSpec(
            num_scalar_prefetch=0,
            grid=(B, n_pix, n_k),                      # reduction axis last
            in_specs=[
                pl.BlockSpec((None, tk, blk), lambda b, j, k: (b, k, j)),
                pl.BlockSpec((C_out, tk), lambda b, j, k: (0, k)),
                pl.BlockSpec((C_out, 1), lambda b, j, k: (0, 0)),
            ],
            out_specs=pl.BlockSpec((None, C_out, blk), lambda b, j, k: (b, 0, j)),
            scratch_shapes=[pltpu.VMEM((C_out, blk), jnp.float32)],
        )
        dim_sem = ("parallel", "parallel", "arbitrary")

    out = pl.pallas_call(
        kernel,
        out_shape=jax.ShapeDtypeStruct((B, C_out, HW_pad), x_nchw.dtype),
        grid_spec=grid_spec,
        compiler_params=pltpu.CompilerParams(
            dimension_semantics=dim_sem,
            vmem_limit_bytes=vmem_limit,
        ),
        cost_estimate=cost,
    )(x, weight, b_col)

    if padded:
        out = out[:, :, :HW]
    return out.reshape(B, C_out, H, W)


# --------------------------------------------------------------------------
# Self test
# --------------------------------------------------------------------------
if __name__ == "__main__":
    key = jax.random.PRNGKey(0)
    kx, kw, kb, kx2, kw2, kb2 = jax.random.split(key, 6)

    # --- small-channel (VPU) path, shapes from the module's typical use ---
    B, C_in, C_out, Hh, Ww = 2, 4, 8, 16, 16
    x = jax.random.normal(kx, (B, C_in, Hh, Ww), dtype=jnp.float32)
    fan_in = C_in  # kernel is 1x1
    bound = 1.0 / (fan_in ** 0.5)
    weight = jax.random.uniform(kw, (C_out, C_in), jnp.float32, -bound, bound)
    bias = jax.random.uniform(kb, (C_out,), jnp.float32, -bound, bound)

    out = jax.block_until_ready(linear_1x1_conv(x, weight, bias))
    ref = jnp.einsum("bchw,oc->bohw", x, weight) + bias[None, :, None, None]
    assert out.shape == (B, C_out, Hh, Ww)
    assert jnp.allclose(out, ref, atol=1e-5, rtol=1e-5)

    # --- larger-channel (MXU) path, still small overall ---
    B2, C_in2, C_out2, H2, W2 = 2, 96, 80, 8, 8
    x2 = jax.random.normal(kx2, (B2, C_in2, H2, W2), dtype=jnp.float32)
    bound2 = 1.0 / (C_in2 ** 0.5)
    w2 = jax.random.uniform(kw2, (C_out2, C_in2), jnp.float32, -bound2, bound2)
    b2 = jax.random.uniform(kb2, (C_out2,), jnp.float32, -bound2, bound2)

    out2 = jax.block_until_ready(linear_1x1_conv(x2, w2, b2))
    ref2 = jnp.einsum("bchw,oc->bohw", x2, w2) + b2[None, :, None, None]
    assert out2.shape == (B2, C_out2, H2, W2)
    assert jnp.allclose(out2, ref2, atol=1e-4, rtol=1e-4)

    print("KERNEL_OK")
</pallas_src>

<mosaic_0001>
module attributes {stable_mosaic.version = 11 : i64} {
  func.func @kernel(%arg0: i32, %arg1: i32, %arg2: memref<1x4x256xf32, #tpu.memory_space<vmem>>, %arg3: memref<8x4xf32, #tpu.memory_space<vmem>>, %arg4: memref<8x1xf32, #tpu.memory_space<vmem>>, %arg5: memref<1x8x256xf32, #tpu.memory_space<vmem>>) attributes {dimension_semantics = [#tpu.dimension_semantics<parallel>, #tpu.dimension_semantics<parallel>], iteration_bounds = array<i64: 2, 1>, scalar_prefetch = 0 : i64, scratch_operands = 0 : i64, tpu.core_type = #tpu.core_type<tc>, window_params = [{transform_indices = @transform_0, window_bounds = array<i64: 1, 4, 256>}, {pipeline_mode = #tpu.pipeline_mode<synchronous>, transform_indices = @transform_1, window_bounds = array<i64: 8, 4>}, {pipeline_mode = #tpu.pipeline_mode<synchronous>, transform_indices = @transform_2, window_bounds = array<i64: 8, 1>}, {transform_indices = @transform_3, window_bounds = array<i64: 1, 8, 256>}]} {
    %c0 = arith.constant 0 : index
    %c0_0 = arith.constant 0 : index
    %0 = vector.load %arg3[%c0, %c0_0] : memref<8x4xf32, #tpu.memory_space<vmem>>, vector<8x4xf32>
    %c0_1 = arith.constant 0 : index
    %c0_2 = arith.constant 0 : index
    %1 = vector.load %arg4[%c0_1, %c0_2] : memref<8x1xf32, #tpu.memory_space<vmem>>, vector<8x1xf32>
    %2 = vector.shape_cast %1 : vector<8x1xf32> to vector<8x1xf32>
    %3 = vector.broadcast %2 : vector<8x1xf32> to vector<8x256xf32>
    %c0_3 = arith.constant 0 : index
    %c0_4 = arith.constant 0 : index
    %c0_5 = arith.constant 0 : index
    %4 = vector.load %arg2[%c0_3, %c0_4, %c0_5] : memref<1x4x256xf32, #tpu.memory_space<vmem>>, vector<1x1x256xf32>
    %5 = vector.shape_cast %4 : vector<1x1x256xf32> to vector<1x256xf32>
    %6 = vector.extract_strided_slice %0 {offsets = [0, 0], sizes = [8, 1], strides = [1, 1]} : vector<8x4xf32> to vector<8x1xf32>
    %7 = vector.broadcast %6 : vector<8x1xf32> to vector<8x256xf32>
    %8 = vector.broadcast %5 : vector<1x256xf32> to vector<8x256xf32>
    %9 = arith.mulf %7, %8 : vector<8x256xf32>
    %10 = arith.addf %3, %9 : vector<8x256xf32>
    %c0_6 = arith.constant 0 : index
    %c1 = arith.constant 1 : index
    %c0_7 = arith.constant 0 : index
    %11 = vector.load %arg2[%c0_6, %c1, %c0_7] : memref<1x4x256xf32, #tpu.memory_space<vmem>>, vector<1x1x256xf32>
    %12 = vector.shape_cast %11 : vector<1x1x256xf32> to vector<1x256xf32>
    %13 = vector.extract_strided_slice %0 {offsets = [0, 1], sizes = [8, 1], strides = [1, 1]} : vector<8x4xf32> to vector<8x1xf32>
    %14 = vector.broadcast %13 : vector<8x1xf32> to vector<8x256xf32>
    %15 = vector.broadcast %12 : vector<1x256xf32> to vector<8x256xf32>
    %16 = arith.mulf %14, %15 : vector<8x256xf32>
    %17 = arith.addf %10, %16 : vector<8x256xf32>
    %c0_8 = arith.constant 0 : index
    %c2 = arith.constant 2 : index
    %c0_9 = arith.constant 0 : index
    %18 = vector.load %arg2[%c0_8, %c2, %c0_9] : memref<1x4x256xf32, #tpu.memory_space<vmem>>, vector<1x1x256xf32>
    %19 = vector.shape_cast %18 : vector<1x1x256xf32> to vector<1x256xf32>
    %20 = vector.extract_strided_slice %0 {offsets = [0, 2], sizes = [8, 1], strides = [1, 1]} : vector<8x4xf32> to vector<8x1xf32>
    %21 = vector.broadcast %20 : vector<8x1xf32> to vector<8x256xf32>
    %22 = vector.broadcast %19 : vector<1x256xf32> to vector<8x256xf32>
    %23 = arith.mulf %21, %22 : vector<8x256xf32>
    %24 = arith.addf %17, %23 : vector<8x256xf32>
    %c0_10 = arith.constant 0 : index
    %c3 = arith.constant 3 : index
    %c0_11 = arith.constant 0 : index
    %25 = vector.load %arg2[%c0_10, %c3, %c0_11] : memref<1x4x256xf32, #tpu.memory_space<vmem>>, vector<1x1x256xf32>
    %26 = vector.shape_cast %25 : vector<1x1x256xf32> to vector<1x256xf32>
    %27 = vector.extract_strided_slice %0 {offsets = [0, 3], sizes = [8, 1], strides = [1, 1]} : vector<8x4xf32> to vector<8x1xf32>
    %28 = vector.broadcast %27 : vector<8x1xf32> to vector<8x256xf32>
    %29 = vector.broadcast %26 : vector<1x256xf32> to vector<8x256xf32>
    %30 = arith.mulf %28, %29 : vector<8x256xf32>
    %31 = arith.addf %24, %30 : vector<8x256xf32>
    %c0_12 = arith.constant 0 : index
    %c0_13 = arith.constant 0 : index
    %c0_14 = arith.constant 0 : index
    %32 = vector.load %arg5[%c0_12, %c0_13, %c0_14] : memref<1x8x256xf32, #tpu.memory_space<vmem>>, vector<1x8x256xf32>
    %33 = vector.shape_cast %32 : vector<1x8x256xf32> to vector<8x256xf32>
    %34 = vector.shape_cast %31 : vector<8x256xf32> to vector<1x8x256xf32>
    tpu.vector_store %arg5[%c0_12, %c0_13, %c0_14], %34 {strides = array<i32>} : memref<1x8x256xf32, #tpu.memory_space<vmem>>, vector<1x8x256xf32>,
    return
  }
  func.func @transform_0(%arg0: i32, %arg1: i32) -> (i32, i32, i32) {
    %c0_i32 = arith.constant 0 : i32
    %c0_i32_0 = arith.constant 0 : i32
    return %arg0, %c0_i32, %arg1 : i32, i32, i32
  }
  func.func @transform_1(%arg0: i32, %arg1: i32) -> (i32, i32) {
    %c0_i32 = arith.constant 0 : i32
    %c0_i32_0 = arith.constant 0 : i32
    %c0_i32_1 = arith.constant 0 : i32
    return %c0_i32, %c0_i32_0 : i32, i32
  }
  func.func @transform_2(%arg0: i32, %arg1: i32) -> (i32, i32) {
    %c0_i32 = arith.constant 0 : i32
    %c0_i32_0 = arith.constant 0 : i32
    %c0_i32_1 = arith.constant 0 : i32
    return %c0_i32, %c0_i32_0 : i32, i32
  }
  func.func @transform_3(%arg0: i32, %arg1: i32) -> (i32, i32, i32) {
    %c0_i32 = arith.constant 0 : i32
    %c0_i32_0 = arith.constant 0 : i32
    return %arg0, %c0_i32, %arg1 : i32, i32, i32
  }
}

</mosaic_0001>

<llo_original>
// kernel: tpu_custom_call.1
$region0: #{tpu_custom_call.1}
  #allocation0 [shape = 'u32[]', space=smem, size = 0x4, offset = 0x4, fixed_abs, tag = 'smem constant byte address 0x4 - core index']
  #allocation1 [shape = 'u32[144,128]{1,0:T(1,128)}', space=vmem, size = 0x12000, scoped, tag = 'internal scratch']
  %s0 = inlined_call_operand.vmem [shape: f32[2,4,256], index: 0, kind: input, shape index: {}]
  %s1 = inlined_call_operand.vmem [shape: f32[8,4], index: 1, kind: input, shape index: {}]
  %s2 = inlined_call_operand.vmem [shape: f32[8,1], index: 2, kind: input, shape index: {}]
  %s3 = inlined_call_operand.hbm [shape: f32[2,8,256], index: 3, kind: output, shape index: {}]
  %s4 = sld [smem:[#allocation0]]
  $region45: #{tpu_custom_call.1} parent=0
    _
  %s6 = ssub.s32 1, %s4
  %s7 = scalar_select 0, %s6, %s4
  $region1: #{tpu_custom_call.1} parent=0
    #allocation2 [shape = 'u8[16384]{0}', space=vmem, size = 0x4000, scoped, tag = 'output window, operand 0']
    #allocation3 [shape = 's32[2]{0}', space=sflag, size = 0x8, scoped, tag = 'scoped memory for tpu_custom_call.1']
    %8 = vsyncpa [#allocation3], 0
    %s9 = scalar_lea.sflag [#allocation3], 1
    %10 = vsyncpa %s9, 0
    loop: start=0, step=1, limit=4
    $region2: #{tpu_custom_call.1} parent=1 // loop_pre_header
      _
    $region3: #{tpu_custom_call.1} parent=1 // loop_header
      %s12 = sphi 0, %s16
      %p13 = scmp.ge.s32.totalorder %s12, 4
      %s19 = sphi 0, %s31
      %s20 = sphi 0, %s27
      %s21 = sphi 0, %s19
      %s22 = sphi 0, %s20
      %s23 = sphi 0, %s21
      %s24 = sphi 0, %s22
      %s36 = sphi 0, %s38
      %s39 = sphi 0, %s36
      %s40 = sphi 0, %s39
      %s56 = sphi 0, %s40
      %s60 = sphi 0, %s60
      %s62 = sphi 0, %s60
      %s63 = sphi 0, %s62
      %s77 = sphi 0, %s63
      %s81 = sphi 0, %s81
      %s83 = sphi 0, %s81
      %s84 = sphi 0, %s83
      %s98 = sphi 0, %s84
      %s106 = sphi 0, %s108
      %s109 = sphi 0, %s106
      %s110 = sphi 0, %s109
      %s126 = sphi 0, %s110
    $region4: #{tpu_custom_call.1} parent=1 // loop_header_branch
      %15 = sbr.rel (%p13) target = $region8
    $region5: #{tpu_custom_call.1} parent=1 // loop_body
      %s17 = ssub.s32 %s12, 1
      %s18 = ssub.s32 %s12, 2
      %s25 = sadd.s32 1, %s20
      %p26 = scmp.ge.s32.totalorder %s25, 1
      %s27 = scalar_select %p26, 0, %s25
      %s28 = sadd.s32 1, %s19
      %s29 = scalar_select %p26, %s28, %s19
      %p30 = scmp.ge.s32.totalorder %s29, 2
      %s31 = scalar_select %p30, 0, %s29
      %s32 = ssub.s32 %s19, %s31
      %s33 = ssub.s32 %s20, %s27
      %s34 = sor.u32 %s32, %s33
      %p35 = scmp.eq.s32.totalorder %s34, 0
      %s37 = sadd.s32 %s36, 1
      %s38 = scalar_select %p35, %s36, %s37
      %p41 = pneg %p35
      %p42 = scmp.eq.s32.totalorder %s12, 1
      %p43 = por %p41, %p42
      %p44 = scmp.ne.s32.totalorder %s36, %s39
      %p45 = scmp.eq.s32.totalorder %s12, 0
      %p46 = por %p44, %p45
      %p47 = scmp.ne.s32.totalorder %s36, %s39
      %p48 = scmp.eq.s32.totalorder %s17, 1
      %p49 = por %p47, %p48
      %p50 = scmp.ne.s32.totalorder %s39, %s40
      %p51 = scmp.eq.s32.totalorder %s17, 0
      %p52 = por %p50, %p51
      %p53 = scmp.ne.s32.totalorder %s39, %s40
      %p54 = scmp.eq.s32.totalorder %s18, 1
      %p55 = por %p53, %p54
      %p57 = scmp.ne.s32.totalorder %s40, %s56
      %p58 = scmp.eq.s32.totalorder %s18, 0
      %p59 = por %p57, %p58
      %s61 = sadd.s32 %s60, 1
      %p64 = scmp.eq.s32.totalorder %s12, 1
      %p65 = scmp.ne.s32.totalorder %s60, %s62
      %p66 = scmp.eq.s32.totalorder %s12, 0
      %p67 = por %p65, %p66
      %p68 = scmp.ne.s32.totalorder %s60, %s62
      %p69 = scmp.eq.s32.totalorder %s17, 1
      %p70 = por %p68, %p69
      %p71 = scmp.ne.s32.totalorder %s62, %s63
      %p72 = scmp.eq.s32.totalorder %s17, 0
      %p73 = por %p71, %p72
      %p74 = scmp.ne.s32.totalorder %s62, %s63
      %p75 = scmp.eq.s32.totalorder %s18, 1
      %p76 = por %p74, %p75
      %p78 = scmp.ne.s32.totalorder %s63, %s77
      %p79 = scmp.eq.s32.totalorder %s18, 0
      %p80 = por %p78, %p79
      %s82 = sadd.s32 %s81, 1
      %p85 = scmp.eq.s32.totalorder %s12, 1
      %p86 = scmp.ne.s32.totalorder %s81, %s83
      %p87 = scmp.eq.s32.totalorder %s12, 0
      %p88 = por %p86, %p87
      %p89 = scmp.ne.s32.totalorder %s81, %s83
      %p90 = scmp.eq.s32.totalorder %s17, 1
      %p91 = por %p89, %p90
      %p92 = scmp.ne.s32.totalorder %s83, %s84
      %p93 = scmp.eq.s32.totalorder %s17, 0
      %p94 = por %p92, %p93
      %p95 = scmp.ne.s32.totalorder %s83, %s84
      %p96 = scmp.eq.s32.totalorder %s18, 1
      %p97 = por %p95, %p96
      %p99 = scmp.ne.s32.totalorder %s84, %s98
      %p100 = scmp.eq.s32.totalorder %s18, 0
      %p101 = por %p99, %p100
      %s102 = ssub.s32 %s19, %s31
      %s103 = ssub.s32 %s20, %s27
      %s104 = sor.u32 %s102, %s103
      %p105 = scmp.eq.s32.totalorder %s104, 0
      %s107 = sadd.s32 %s106, 1
      %s108 = scalar_select %p105, %s106, %s107
      %p111 = pneg %p105
      %p112 = scmp.eq.s32.totalorder %s12, 1
      %p113 = por %p111, %p112
      %p114 = scmp.ne.s32.totalorder %s106, %s109
      %p115 = scmp.eq.s32.totalorder %s12, 0
      %p116 = por %p114, %p115
      %p117 = scmp.ne.s32.totalorder %s106, %s109
      %p118 = scmp.eq.s32.totalorder %s17, 1
      %p119 = por %p117, %p118
      %p120 = scmp.ne.s32.totalorder %s109, %s110
      %p121 = scmp.eq.s32.totalorder %s17, 0
      %p122 = por %p120, %p121
      %p123 = scmp.ne.s32.totalorder %s109, %s110
      %p124 = scmp.eq.s32.totalorder %s18, 1
      %p125 = por %p123, %p124
      %p127 = scmp.ne.s32.totalorder %s110, %s126
      %p128 = scmp.eq.s32.totalorder %s18, 0
      %p129 = por %p127, %p128
      %p130 = scmp.le.s32.totalorder 1, %s12
      %p131 = scmp.lt.s32.totalorder %s12, 3
      %p132 = pnand %p130, %p131
      %p133 = pneg %p132
      // Predicated region
      $region9: #{tpu_custom_call.1} parent=5 // pred_check
        _
      $region10: #{tpu_custom_call.1} parent=5 // pred_check_branch
        %135 = sbr.rel (%p132) target = $region12
      $region11: #{tpu_custom_call.1} parent=5 // pred_region
        %s136 = ssub.s32 %s12, 1
        // Predicated region
        $region13: #{tpu_custom_call.1} parent=11 // pred_check
          %p137 = pneg %p73
        $region14: #{tpu_custom_call.1} parent=11 // pred_check_branch
          %139 = sbr.rel (%p137) target = $region16
        $region15: #{tpu_custom_call.1} parent=11 // pred_region
          _
        $region16: #{tpu_custom_call.1} parent=11 // pred_fallthru
          _
        // Predicated region
        $region17: #{tpu_custom_call.1} parent=11 // pred_check
          %p140 = pneg %p94
        $region18: #{tpu_custom_call.1} parent=11 // pred_check_branch
          %142 = sbr.rel (%p140) target = $region20
        $region19: #{tpu_custom_call.1} parent=11 // pred_region
          _
        $region20: #{tpu_custom_call.1} parent=11 // pred_fallthru
          _
      $region12: #{tpu_custom_call.1} parent=5 // pred_fallthru
        _
      %p143 = scmp.lt.s32.totalorder %s12, 2
      // Predicated region
      $region21: #{tpu_custom_call.1} parent=5 // pred_check
        %p144 = pneg %p143
      $region22: #{tpu_custom_call.1} parent=5 // pred_check_branch
        %146 = sbr.rel (%p144) target = $region24
      $region23: #{tpu_custom_call.1} parent=5 // pred_region
        // Predicated region
        $region25: #{tpu_custom_call.1} parent=23 // pred_check
          %p147 = pneg %p46
        $region26: #{tpu_custom_call.1} parent=23 // pred_check_branch
          %149 = sbr.rel (%p147) target = $region28
        $region27: #{tpu_custom_call.1} parent=23 // pred_region
          %s150 = smul.u32 2, %s20
          %p151 = scmp.lt.s32.totalorder %s19, 1
          %s152 = scalar_select %p151, %s19, 1
          %p153 = scmp.lt.s32.totalorder %s150, 1
          %s154 = scalar_select %p153, %s150, 1
          %s155 = smul.addr %s152, 2
          %s156 = sadd.s32 %s154, %s155
          %s157 = smul.addr %s156, 4
          %s158 = scalar_lea.vmem %s0, %s157
          %s159 = smul.u32 2, %s20
        $region28: #{tpu_custom_call.1} parent=23 // pred_fallthru
          _
      $region24: #{tpu_custom_call.1} parent=5 // pred_fallthru
        _
      %p160 = scmp.le.s32.totalorder 1, %s12
      %p161 = scmp.lt.s32.totalorder %s12, 3
      %p162 = pnand %p160, %p161
      %p163 = pneg %p162
      // Predicated region
      $region29: #{tpu_custom_call.1} parent=5 // pred_check
        _
      $region30: #{tpu_custom_call.1} parent=5 // pred_check_branch
        %165 = sbr.rel (%p162) target = $region32
      $region31: #{tpu_custom_call.1} parent=5 // pred_region
        %s166 = ssub.s32 %s12, 1
        %s167 = smul.u32 2, %s22
        %p168 = scmp.lt.s32.totalorder %s21, 1
        %s169 = scalar_select %p168, %s21, 1
        %p170 = scmp.lt.s32.totalorder %s167, 1
        %s171 = scalar_select %p170, %s167, 1
        %s172 = smul.addr %s169, 2
        %s173 = sadd.s32 %s171, %s172
        %s174 = smul.addr %s173, 4
        %s175 = scalar_lea.vmem %s0, %s174
        %p176 = pneg %p52
        %p177 = pneg %p49
        %p178 = pneg %p73
        %p179 = pneg %p70
        %p180 = pneg %p94
        %p181 = pneg %p91
        %p182 = pneg %p122
        %p183 = pneg %p119
        %s184 = sand.u32 %s109, 1
        %s185 = scalar_lea.sflag [#allocation3], %s184
        %s186 = sand.u32 %s109, 1
        %s187 = smul.addr %s186, 16
        %s188 = scalar_lea.vmem [#allocation2], %s187
        %s189 = smul.u32 2, %s22
        %p190 = scmp.lt.s32.totalorder %s21, 1
        %s191 = scalar_select %p190, %s21, 1
        %p192 = scmp.lt.s32.totalorder %s189, 1
        %s193 = scalar_select %p192, %s189, 1
        %s194 = smul.addr %s191, 2
        %s195 = sadd.s32 %s193, %s194
        %s196 = smul.addr %s195, 4
        %s197 = scalar_lea.vmem %s0, %s196
        %s198 = smul.u32 2, %s22
        %s199 = smul.u32 2, %s22
        %v200 = vld [vmem:[%s1] sm:$0xff]
        %v201 = vld [vmem:[%s2] sm:$0xff]
        %203 = vset.pattern.permute.xlu0 0
        %204 = vperm.xlu0 %203, %v201
        %v205 = vpop.permute.xlu0 %204
        %v207 = vld [vmem:[%s197] ss:$4 sm:$0x3]
        %209 = vset.pattern.permute.xlu0 0
        %210 = vperm.xlu0 %209, %v200
        %v211 = vpop.permute.xlu0 %210
        %v214 = vlaneseq
        %v215 = vshrl.u32 %v214, 7
        %v216 = vsub.s32 0, %v215
        %v217 = vrot.slane %v207, %v216
        %v218 = vlaneseq
        %v219 = vshrl.u32 %v218, 7
        %v220 = vsub.s32 1, %v219
        %v221 = vrot.slane %v207, %v220
        %v224 = vmul.f32 %v211, %v217
        %v225 = vmul.f32 %v211, %v221
        %v226 = vadd.f32 %v205, %v224
        %v227 = vadd.f32 %v205, %v225
        %s228 = scalar_lea.vmem %s197, 1
        %v229 = vld [vmem:[%s228] ss:$4 sm:$0x3]
        %230 = vset.pattern.permute.xlu0 1
        %231 = vperm.xlu0 %230, %v200
        %v232 = vpop.permute.xlu0 %231
        %v235 = vlaneseq
        %v236 = vshrl.u32 %v235, 7
        %v237 = vsub.s32 0, %v236
        %v238 = vrot.slane %v229, %v237
        %v239 = vlaneseq
        %v240 = vshrl.u32 %v239, 7
        %v241 = vsub.s32 1, %v240
        %v242 = vrot.slane %v229, %v241
        %v245 = vmul.f32 %v232, %v238
        %v246 = vmul.f32 %v232, %v242
        %v247 = vadd.f32 %v226, %v245
        %v248 = vadd.f32 %v227, %v246
        %s249 = scalar_lea.vmem %s197, 2
        %v250 = vld [vmem:[%s249] ss:$4 sm:$0x3]
        %251 = vset.pattern.permute.xlu0 2
        %252 = vperm.xlu0 %251, %v200
        %v253 = vpop.permute.xlu0 %252
        %v256 = vlaneseq
        %v257 = vshrl.u32 %v256, 7
        %v258 = vsub.s32 0, %v257
        %v259 = vrot.slane %v250, %v258
        %v260 = vlaneseq
        %v261 = vshrl.u32 %v260, 7
        %v262 = vsub.s32 1, %v261
        %v263 = vrot.slane %v250, %v262
        %v266 = vmul.f32 %v253, %v259
        %v267 = vmul.f32 %v253, %v263
        %v268 = vadd.f32 %v247, %v266
        %v269 = vadd.f32 %v248, %v267
        %s270 = scalar_lea.vmem %s197, 3
        %v271 = vld [vmem:[%s270] ss:$4 sm:$0x3]
        %272 = vset.pattern.permute.xlu0 3
        %273 = vperm.xlu0 %272, %v200
        %v274 = vpop.permute.xlu0 %273
        %v277 = vlaneseq
        %v278 = vshrl.u32 %v277, 7
        %v279 = vsub.s32 0, %v278
        %v280 = vrot.slane %v271, %v279
        %v281 = vlaneseq
        %v282 = vshrl.u32 %v281, 7
        %v283 = vsub.s32 1, %v282
        %v284 = vrot.slane %v271, %v283
        %v287 = vmul.f32 %v274, %v280
        %v288 = vmul.f32 %v274, %v284
        %v289 = vadd.f32 %v268, %v287
        %v290 = vadd.f32 %v269, %v288
        %291 = vst [vmem:[%s188] sm:$0xff] %v289
        %292 = vst [vmem:[%s188 + $0x8] sm:$0xff] %v290
        %s293 = sand.u32 %s109, 1
        %s294 = scalar_lea.sflag [#allocation3], %s293
        %s295 = sand.u32 %s109, 1
        %s296 = smul.addr %s295, 16
        %s297 = scalar_lea.vmem [#allocation2], %s296
        // Predicated region
        $region33: #{tpu_custom_call.1} parent=31 // pred_check
          %p298 = pneg %p119
        $region34: #{tpu_custom_call.1} parent=31 // pred_check_branch
          %300 = sbr.rel (%p298) target = $region36
        $region35: #{tpu_custom_call.1} parent=31 // pred_region
          %s301 = smul.u32 2, %s22
          %s303 = ssub.s32 256, 256
          %304 = vsyncadd %s294, %s303
          %s305 = smul.addr %s21, 2
          %s306 = sadd.s32 %s301, %s305
          %s307 = smul.addr %s306, 128
          %s308 = scalar_lea.hbm %s3, %s307
          %s310 = sshll.u32 %s297, 4
          %s311 = int_to_ptr.vmem [resolvable:$true] %s310
          %313 = dma.vmem_to_hbm [thread:$0]  %s311, 256, %s308, %s294
        $region36: #{tpu_custom_call.1} parent=31 // pred_fallthru
          _
      $region32: #{tpu_custom_call.1} parent=5 // pred_fallthru
        _
      %p314 = scmp.le.s32.totalorder 2, %s12
      // Predicated region
      $region37: #{tpu_custom_call.1} parent=5 // pred_check
        %p315 = pneg %p314
      $region38: #{tpu_custom_call.1} parent=5 // pred_check_branch
        %317 = sbr.rel (%p315) target = $region40
      $region39: #{tpu_custom_call.1} parent=5 // pred_region
        %s318 = ssub.s32 %s12, 2
        // Predicated region
        $region41: #{tpu_custom_call.1} parent=39 // pred_check
          %p319 = pneg %p125
        $region42: #{tpu_custom_call.1} parent=39 // pred_check_branch
          %321 = sbr.rel (%p319) target = $region44
        $region43: #{tpu_custom_call.1} parent=39 // pred_region
          %s322 = sand.u32 %s110, 1
          %s323 = scalar_lea.sflag [#allocation3], %s322
          %s324 = sand.u32 %s110, 1
          %s325 = smul.addr %s324, 16
          %s326 = scalar_lea.vmem [#allocation2], %s325
          %327 = dma.done %s323, 256
        $region44: #{tpu_custom_call.1} parent=39 // pred_fallthru
          _
      $region40: #{tpu_custom_call.1} parent=5 // pred_fallthru
        _
    $region6: #{tpu_custom_call.1} parent=1 // loop_footer
      %s16 = sadd.s32 1, %s12
    $region7: #{tpu_custom_call.1} parent=1 // loop_footer_branch
      %11 = sbr.rel target = $region3
    $region8: #{tpu_custom_call.1} parent=1 // loop_exit
      _
    %328 = vsyncpa [#allocation3], 1
    %s329 = scalar_lea.sflag [#allocation3], 1
    %330 = vsyncpa %s329, 1

</llo_original>
